<compile_context>
chip_gen: v6e
topology: v6e:2x2x1
jax: 0.10.0
libtpu: 0.0.40
codegen_flags: <defaults>
</compile_context>

<pallas_src>
import functools

import numpy as np
import jax
import jax.numpy as jnp
from jax import lax
from jax.experimental import pallas as pl
from jax.experimental.pallas import tpu as pltpu

OUT_W = 8  # output slab width: value | logp | entropy | action | 4 pad cols


def _orthogonal(shape, gain, seed):
    """Deterministic orthogonal init (matches nn.init.orthogonal_ semantics)."""
    rng = np.random.RandomState(seed)
    rows, cols = shape
    flat = rng.normal(size=(max(rows, cols), min(rows, cols)))
    q, r = np.linalg.qr(flat)
    q = q * np.sign(np.diag(r))
    if rows < cols:
        q = q.T
    return (gain * q[:rows, :cols]).astype(np.float32)


def _policy_kernel(feat_ref, w_ref, b_ref, out_ref, *, num_actions):
    feat = feat_ref[...]                                             # [Bt, H] f32

    # Fused actor+critic projection: one MXU matmul -> [Bt, A+1]
    fused = jnp.dot(feat, w_ref[...],
                    preferred_element_type=jnp.float32) + b_ref[...]
    logits = fused[:, :num_actions]                                  # [Bt, A]
    value = fused[:, num_actions:num_actions + 1]                    # [Bt, 1]

    # Numerically stable softmax statistics.
    m = jnp.max(logits, axis=-1, keepdims=True)                      # [Bt, 1]
    z = logits - m
    e = jnp.exp(z)
    s = jnp.sum(e, axis=-1, keepdims=True)
    log_s = jnp.log(s)

    # Deterministic action = argmax(logits); reuse m, lowest-index tie-break.
    col = lax.broadcasted_iota(jnp.int32, logits.shape, 1)           # [Bt, A]
    action = jnp.min(jnp.where(logits == m, col, num_actions),
                     axis=-1, keepdims=True)                         # [Bt, 1] i32

    # action_log_probs = log_softmax(logits)[action]  (one-hot gather).
    onehot = (col == action).astype(jnp.float32)
    logp = jnp.sum((z - log_s) * onehot, axis=-1, keepdims=True)     # [Bt, 1]

    # Entropy without materializing probs: log(s) - sum(e*z)/s.  Exact divide:
    # at [Bt,1] the cost is negligible and evaluate_actions wants exactness.
    ent = log_s - jnp.sum(e * z, axis=-1, keepdims=True) / s         # [Bt, 1]

    # Action stored as f32: exact for num_actions < 2^24 (always true here).
    act_f = action.astype(jnp.float32)

    # Pack into the narrow [Bt, 8] slab:
    #   col 0 = value, col 1 = logp, col 2 = entropy, cols >= 3 = action.
    # At width 8 this where-chain is only ~Bt/8 lightly-occupied vreg ops.
    out_col = lax.broadcasted_iota(jnp.int32, out_ref.shape, 1)
    packed = jnp.where(out_col == 0, value,
             jnp.where(out_col == 1, logp,
             jnp.where(out_col == 2, ent, act_f)))
    out_ref[...] = packed


def _round_up(x, m):
    return ((x + m - 1) // m) * m


def _pick_batch_tile(batch, cap=1024):
    """Fixed large tile; >=2 grid steps when batch is big enough (v7x 2 TCs)."""
    if batch <= 256:
        return batch                      # single full-extent block
    half = (batch + 1) // 2
    return min(cap, _round_up(half, 128))


def policy_act(features, w_fused, b_fused, num_actions):
    """features: [B, H] f32; w_fused: [H, A+1]; b_fused: [1, A+1].

    Returns (value [B,1] f32, action [B,1] i32, logp [B,1] f32, ent [B,1] f32).
    """
    B, H = features.shape
    Np = w_fused.shape[1]                       # A + 1
    Bt = _pick_batch_tile(B)
    grid = (pl.cdiv(B, Bt),)                    # ragged last block is fine:
                                                # rows independent, OOB writes dropped

    kernel = functools.partial(_policy_kernel, num_actions=num_actions)
    cost = pl.CostEstimate(
        flops=2 * B * H * Np + 10 * B * num_actions,
        transcendentals=B * (num_actions + 2),
        bytes_accessed=B * H * 4 + H * Np * 4 + Np * 4 + B * OUT_W * 4,
    )

    packed = pl.pallas_call(
        kernel,
        out_shape=jax.ShapeDtypeStruct((B, OUT_W), jnp.float32),
        grid=grid,
        in_specs=[
            pl.BlockSpec((Bt, H), lambda i: (i, 0)),     # features, batch-tiled
            pl.BlockSpec((H, Np), lambda i: (0, 0)),     # fused weights, VMEM-resident
            pl.BlockSpec((1, Np), lambda i: (0, 0)),     # fused bias, VMEM-resident
        ],
        out_specs=pl.BlockSpec((Bt, OUT_W), lambda i: (i, 0)),
        compiler_params=pltpu.CompilerParams(
            dimension_semantics=("parallel",)),
        cost_estimate=cost,
    )(features, w_fused, b_fused)

    value = packed[:, 0:1]
    logp = packed[:, 1:2]
    ent = packed[:, 2:3]
    action = packed[:, 3:4].astype(jnp.int32)
    return value, action, logp, ent


if __name__ == "__main__":
    # Shapes consistent with the module: hidden=32, dim_actions=4.
    H, A = 32, 4
    key = jax.random.PRNGKey(0)

    # CategoricalNet: Linear(H, A), orthogonal init gain=0.01, bias=0
    w_action = _orthogonal((A, H), gain=0.01, seed=1)            # torch layout [out, in]
    b_action = np.zeros((1, A), dtype=np.float32)
    # CriticHead: Linear(H, 1), orthogonal init gain=1, bias=0
    w_critic = _orthogonal((1, H), gain=1.0, seed=2)
    b_critic = np.zeros((1, 1), dtype=np.float32)

    # Host-side fusion of actor + critic projections: [H, A+1] / [1, A+1].
    w_fused = jnp.concatenate(
        [jnp.asarray(w_action.T), jnp.asarray(w_critic.T)], axis=1)
    b_fused = jnp.concatenate(
        [jnp.asarray(b_action), jnp.asarray(b_critic)], axis=1)

    def reference(features):
        logits = features @ jnp.asarray(w_action.T) + jnp.asarray(b_action)
        value = features @ jnp.asarray(w_critic.T) + jnp.asarray(b_critic)
        logp_all = jax.nn.log_softmax(logits, axis=-1)
        action = jnp.argmax(logits, axis=-1).astype(jnp.int32)
        logp = jnp.take_along_axis(logp_all, action[:, None].astype(jnp.int32), axis=-1)
        ent = -jnp.sum(jnp.exp(logp_all) * logp_all, axis=-1)
        return value, action, logp, ent

    # B=8: small-batch demo (single block).  B=300: exercises the cdiv grid
    # with a ragged last block and >=2 parallel grid steps.
    for i, B in enumerate((8, 300)):
        k = jax.random.fold_in(key, i)
        features = jax.random.normal(k, (B, H), dtype=jnp.float32)
        # rnn_hidden_states / global_map would pass through unchanged (abstract net).

        value, action, action_log_probs, ent_rows = policy_act(
            features, w_fused, b_fused, num_actions=A)
        distribution_entropy = jnp.mean(ent_rows)   # evaluate_actions: entropy().mean()
        jax.block_until_ready(
            (value, action, action_log_probs, distribution_entropy))

        v_ref, a_ref, lp_ref, e_ref = reference(features)
        assert jnp.allclose(value, v_ref, atol=1e-5), ("value", B)
        assert jnp.array_equal(action[:, 0], a_ref), ("action", B)
        assert jnp.allclose(action_log_probs, lp_ref, atol=1e-5), ("logp", B)
        assert jnp.allclose(ent_rows[:, 0], e_ref, atol=1e-5), ("entropy", B)

    print("KERNEL_OK")
</pallas_src>

<mosaic_0001>
module attributes {stable_mosaic.version = 11 : i64} {
  func.func @_policy_kernel(%arg0: i32, %arg1: memref<8x32xf32, #tpu.memory_space<vmem>>, %arg2: memref<32x5xf32, #tpu.memory_space<vmem>>, %arg3: memref<1x5xf32, #tpu.memory_space<vmem>>, %arg4: memref<8x8xf32, #tpu.memory_space<vmem>>) attributes {dimension_semantics = [#tpu.dimension_semantics<parallel>], iteration_bounds = array<i64: 1>, scalar_prefetch = 0 : i64, scratch_operands = 0 : i64, tpu.core_type = #tpu.core_type<tc>, window_params = [{transform_indices = @transform_0, window_bounds = array<i64: 8, 32>}, {pipeline_mode = #tpu.pipeline_mode<synchronous>, transform_indices = @transform_1, window_bounds = array<i64: 32, 5>}, {pipeline_mode = #tpu.pipeline_mode<synchronous>, transform_indices = @transform_2, window_bounds = array<i64: 1, 5>}, {transform_indices = @transform_3, window_bounds = array<i64: 8, 8>}]} {
    %c0 = arith.constant 0 : index
    %c0_0 = arith.constant 0 : index
    %0 = vector.load %arg1[%c0, %c0_0] : memref<8x32xf32, #tpu.memory_space<vmem>>, vector<8x32xf32>
    %c0_1 = arith.constant 0 : index
    %c0_2 = arith.constant 0 : index
    %1 = vector.load %arg2[%c0_1, %c0_2] : memref<32x5xf32, #tpu.memory_space<vmem>>, vector<32x5xf32>
    %cst = arith.constant dense<0.000000e+00> : vector<8x5xf32>
    %2 = tpu.matmul %0, %1, %cst {dimension_numbers = #tpu.dot_dimension_numbers<[1], [0], [0], [1], [0, 0, 1, 1], [], []>} : vector<8x32xf32>, vector<32x5xf32>, vector<8x5xf32> -> vector<8x5xf32>
    %c0_3 = arith.constant 0 : index
    %c0_4 = arith.constant 0 : index
    %3 = vector.load %arg3[%c0_3, %c0_4] : memref<1x5xf32, #tpu.memory_space<vmem>>, vector<1x5xf32>
    %4 = vector.broadcast %3 : vector<1x5xf32> to vector<8x5xf32>
    %5 = arith.addf %2, %4 : vector<8x5xf32>
    %6 = vector.extract_strided_slice %5 {offsets = [0, 0], sizes = [8, 4], strides = [1, 1]} : vector<8x5xf32> to vector<8x4xf32>
    %7 = vector.extract_strided_slice %5 {offsets = [0, 4], sizes = [8, 1], strides = [1, 1]} : vector<8x5xf32> to vector<8x1xf32>
    %cst_5 = arith.constant dense<0xFF800000> : vector<8xf32>
    %8 = vector.multi_reduction <maximumf>, %6, %cst_5 [1] : vector<8x4xf32> to vector<8xf32>
    %9 = vector.shape_cast %8 : vector<8xf32> to vector<8x1xf32>
    %10 = vector.broadcast %9 : vector<8x1xf32> to vector<8x4xf32>
    %11 = arith.subf %6, %10 : vector<8x4xf32>
    %12 = math.exp %11 : vector<8x4xf32>
    %cst_6 = arith.constant dense<0.000000e+00> : vector<8xf32>
    %13 = vector.multi_reduction <add>, %12, %cst_6 [1] : vector<8x4xf32> to vector<8xf32>
    %14 = vector.shape_cast %13 : vector<8xf32> to vector<8x1xf32>
    %15 = math.log %14 : vector<8x1xf32>
    %16 = tpu.iota {dimensions = array<i32: 1>} : vector<8x4xi32>
    %17 = vector.broadcast %9 : vector<8x1xf32> to vector<8x4xf32>
    %18 = arith.cmpf oeq, %6, %17 : vector<8x4xf32>
    %c4_i32 = arith.constant 4 : i32
    %19 = vector.broadcast %c4_i32 : i32 to vector<8x4xi32>
    %20 = arith.select %18, %16, %19 : vector<8x4xi1>, vector<8x4xi32>
    %cst_7 = arith.constant dense<2147483647> : vector<8xi32>
    %21 = vector.multi_reduction <minsi>, %20, %cst_7 [1] : vector<8x4xi32> to vector<8xi32>
    %22 = vector.shape_cast %21 : vector<8xi32> to vector<8x1xi32>
    %23 = vector.broadcast %22 : vector<8x1xi32> to vector<8x4xi32>
    %24 = arith.cmpi eq, %16, %23 : vector<8x4xi32>
    %25 = arith.extui %24 : vector<8x4xi1> to vector<8x4xi32>
    %26 = arith.sitofp %25 : vector<8x4xi32> to vector<8x4xf32>
    %27 = vector.broadcast %15 : vector<8x1xf32> to vector<8x4xf32>
    %28 = arith.subf %11, %27 : vector<8x4xf32>
    %29 = arith.mulf %28, %26 : vector<8x4xf32>
    %cst_8 = arith.constant dense<0.000000e+00> : vector<8xf32>
    %30 = vector.multi_reduction <add>, %29, %cst_8 [1] : vector<8x4xf32> to vector<8xf32>
    %31 = vector.shape_cast %30 : vector<8xf32> to vector<8x1xf32>
    %32 = arith.mulf %12, %11 : vector<8x4xf32>
    %cst_9 = arith.constant dense<0.000000e+00> : vector<8xf32>
    %33 = vector.multi_reduction <add>, %32, %cst_9 [1] : vector<8x4xf32> to vector<8xf32>
    %34 = vector.shape_cast %33 : vector<8xf32> to vector<8x1xf32>
    %35 = arith.divf %34, %14 : vector<8x1xf32>
    %36 = arith.subf %15, %35 : vector<8x1xf32>
    %37 = arith.sitofp %22 : vector<8x1xi32> to vector<8x1xf32>
    %38 = tpu.iota {dimensions = array<i32: 1>} : vector<8x8xi32>
    %c0_i32 = arith.constant 0 : i32
    %39 = vector.broadcast %c0_i32 : i32 to vector<8x8xi32>
    %40 = arith.cmpi eq, %38, %39 : vector<8x8xi32>
    %c1_i32 = arith.constant 1 : i32
    %41 = vector.broadcast %c1_i32 : i32 to vector<8x8xi32>
    %42 = arith.cmpi eq, %38, %41 : vector<8x8xi32>
    %c2_i32 = arith.constant 2 : i32
    %43 = vector.broadcast %c2_i32 : i32 to vector<8x8xi32>
    %44 = arith.cmpi eq, %38, %43 : vector<8x8xi32>
    %45 = vector.shape_cast %36 : vector<8x1xf32> to vector<8x1xf32>
    %46 = vector.broadcast %45 : vector<8x1xf32> to vector<8x8xf32>
    %47 = vector.shape_cast %37 : vector<8x1xf32> to vector<8x1xf32>
    %48 = vector.broadcast %47 : vector<8x1xf32> to vector<8x8xf32>
    %49 = arith.select %44, %46, %48 : vector<8x8xi1>, vector<8x8xf32>
    %50 = vector.shape_cast %31 : vector<8x1xf32> to vector<8x1xf32>
    %51 = vector.broadcast %50 : vector<8x1xf32> to vector<8x8xf32>
    %52 = arith.select %42, %51, %49 : vector<8x8xi1>, vector<8x8xf32>
    %53 = vector.shape_cast %7 : vector<8x1xf32> to vector<8x1xf32>
    %54 = vector.broadcast %53 : vector<8x1xf32> to vector<8x8xf32>
    %55 = arith.select %40, %54, %52 : vector<8x8xi1>, vector<8x8xf32>
    %c0_10 = arith.constant 0 : index
    %c0_11 = arith.constant 0 : index
    %56 = vector.load %arg4[%c0_10, %c0_11] : memref<8x8xf32, #tpu.memory_space<vmem>>, vector<8x8xf32>
    tpu.vector_store %arg4[%c0_10, %c0_11], %55 {strides = array<i32>} : memref<8x8xf32, #tpu.memory_space<vmem>>, vector<8x8xf32>,
    return
  }
  func.func @transform_0(%arg0: i32) -> (i32, i32) {
    %c0_i32 = arith.constant 0 : i32
    %c0_i32_0 = arith.constant 0 : i32
    return %arg0, %c0_i32 : i32, i32
  }
  func.func @transform_1(%arg0: i32) -> (i32, i32) {
    %c0_i32 = arith.constant 0 : i32
    %c0_i32_0 = arith.constant 0 : i32
    %c0_i32_1 = arith.constant 0 : i32
    return %c0_i32, %c0_i32_0 : i32, i32
  }
  func.func @transform_2(%arg0: i32) -> (i32, i32) {
    %c0_i32 = arith.constant 0 : i32
    %c0_i32_0 = arith.constant 0 : i32
    %c0_i32_1 = arith.constant 0 : i32
    return %c0_i32, %c0_i32_0 : i32, i32
  }
  func.func @transform_3(%arg0: i32) -> (i32, i32) {
    %c0_i32 = arith.constant 0 : i32
    %c0_i32_0 = arith.constant 0 : i32
    return %arg0, %c0_i32 : i32, i32
  }
}

</mosaic_0001>

<llo_original>
// kernel: tpu_custom_call.1
$region0: #{tpu_custom_call.1}
  #allocation0 [shape = 'u32[]', space=smem, size = 0x4, offset = 0x4, fixed_abs, tag = 'smem constant byte address 0x4 - core index']
  #allocation1 [shape = 'u32[144,128]{1,0:T(1,128)}', space=vmem, size = 0x12000, scoped, tag = 'internal scratch']
  %s0 = inlined_call_operand.vmem [shape: f32[8,32], index: 0, kind: input, shape index: {}]
  %s1 = inlined_call_operand.vmem [shape: f32[32,5], index: 1, kind: input, shape index: {}]
  %s2 = inlined_call_operand.vmem [shape: f32[1,5], index: 2, kind: input, shape index: {}]
  %s3 = inlined_call_operand.hbm [shape: f32[8,8], index: 3, kind: output, shape index: {}]
  %s4 = sld [smem:[#allocation0]]
  $region22: #{tpu_custom_call.1} parent=0
    _
  %s6 = ssub.s32 1, %s4
  %s7 = scalar_select 0, %s6, %s4
  $region1: #{tpu_custom_call.1} parent=0
    #allocation2 [shape = 'u8[4096]{0}', space=vmem, size = 0x1000, scoped, tag = 'output window, operand 0, single buffered']
    #allocation3 [shape = 's32[1]{0}', space=sflag, size = 0x4, scoped, tag = 'scoped memory for tpu_custom_call.1']
    %8 = vsyncpa [#allocation3], 0
    // Predicated region
    $region2: #{tpu_custom_call.1} parent=1 // pred_check
      _
    $region3: #{tpu_custom_call.1} parent=1 // pred_check_branch
      %10 = sbr.rel (0) target = $region5
    $region4: #{tpu_custom_call.1} parent=1 // pred_region
      _
    $region5: #{tpu_custom_call.1} parent=1 // pred_fallthru
      _
    // Predicated region
    $region6: #{tpu_custom_call.1} parent=1 // pred_check
      _
    $region7: #{tpu_custom_call.1} parent=1 // pred_check_branch
      %12 = sbr.rel (0) target = $region9
    $region8: #{tpu_custom_call.1} parent=1 // pred_region
      _
    $region9: #{tpu_custom_call.1} parent=1 // pred_fallthru
      _
    // Predicated region
    $region10: #{tpu_custom_call.1} parent=1 // pred_check
      _
    $region11: #{tpu_custom_call.1} parent=1 // pred_check_branch
      %14 = sbr.rel (0) target = $region13
    $region12: #{tpu_custom_call.1} parent=1 // pred_region
      _
    $region13: #{tpu_custom_call.1} parent=1 // pred_fallthru
      _
    %v15 = vld [vmem:[%s0] sm:$0xff]
    %v16 = vld [vmem:[%s1] sm:$0xff]
    %v17 = vld [vmem:[%s1 + $0x8] sm:$0xff]
    %v18 = vld [vmem:[%s1 + $0x10] sm:$0xff]
    %v19 = vld [vmem:[%s1 + $0x18] sm:$0xff]
    %v20 = vld [vmem:[%s2] sm:$0x1]
    %v22 = vlaneseq
    %v23 = vshrl.u32 %v22, 7
    %v24 = vsub.s32 0, %v23
    %v25 = vrot.slane %v20, %v24
    %vm27 = vcmask 261120
    %v29 = vsel %vm27, %v15, 0
    %31 = vmatprep.subr.mxu0 0.0
    %32 = vmatpush1.msra.mxu0 0.0
    %33 = vmatprep.subr.mxu0 0.0
    %34 = vmatpush1.msra.mxu0 0.0
    %35 = vmatprep.subr.mxu0 0.0
    %36 = vmatpush1.msra.mxu0 0.0
    %37 = vmatprep.subr.mxu0 0.0
    %38 = vmatpush1.msra.mxu0 0.0
    %39 = vmatprep.subr.mxu0 0.0
    %40 = vmatpush1.msra.mxu0 0.0
    %41 = vmatprep.subr.mxu0 0.0
    %42 = vmatpush1.msra.mxu0 0.0
    %43 = vmatprep.subr.mxu0 0.0
    %44 = vmatpush1.msra.mxu0 0.0
    %45 = vmatprep.subr.mxu0 0.0
    %46 = vmatpush1.msra.mxu0 0.0
    %47 = vmatprep.subr.mxu0 0.0
    %48 = vmatpush1.msra.mxu0 0.0
    %49 = vmatprep.subr.mxu0 0.0
    %50 = vmatpush1.msra.mxu0 0.0
    %51 = vmatprep.subr.mxu0 0.0
    %52 = vmatpush1.msra.mxu0 0.0
    %53 = vmatprep.subr.mxu0 0.0
    %54 = vmatpush1.msra.mxu0 0.0
    %55 = vmatprep.subr.mxu0 0.0
    %56 = vmatpush1.msra.mxu0 %v19
    %57 = vmatprep.subr.mxu0 0.0
    %58 = vmatpush1.msra.mxu0 %v18
    %59 = vmatprep.subr.mxu0 0.0
    %60 = vmatpush1.msra.mxu0 %v17
    %61 = vmatprep.subr.mxu0 0.0
    %62 = vmatpush1.msra.mxu0 %v16
    %63 = vmatprep.subr.mxu0 0.0
    %64 = vmatpush2.msra.mxu0 0.0
    %65 = vmatprep.subr.mxu0 0.0
    %66 = vmatpush2.msra.mxu0 0.0
    %67 = vmatprep.subr.mxu0 0.0
    %68 = vmatpush2.msra.mxu0 0.0
    %69 = vmatprep.subr.mxu0 0.0
    %70 = vmatpush2.msra.mxu0 0.0
    %71 = vmatprep.subr.mxu0 0.0
    %72 = vmatpush2.msra.mxu0 0.0
    %73 = vmatprep.subr.mxu0 0.0
    %74 = vmatpush2.msra.mxu0 0.0
    %75 = vmatprep.subr.mxu0 0.0
    %76 = vmatpush2.msra.mxu0 0.0
    %77 = vmatprep.subr.mxu0 0.0
    %78 = vmatpush2.msra.mxu0 0.0
    %79 = vmatprep.subr.mxu0 0.0
    %80 = vmatpush2.msra.mxu0 0.0
    %81 = vmatprep.subr.mxu0 0.0
    %82 = vmatpush2.msra.mxu0 0.0
    %83 = vmatprep.subr.mxu0 0.0
    %84 = vmatpush2.msra.mxu0 0.0
    %85 = vmatprep.subr.mxu0 0.0
    %86 = vmatpush2.msra.mxu0 0.0
    %87 = vmatprep.subr.mxu0 0.0
    %88 = vmatpush2.msra.mxu0 0.0
    %89 = vmatprep.subr.mxu0 0.0
    %90 = vmatpush2.msra.mxu0 0.0
    %91 = vmatprep.subr.mxu0 0.0
    %92 = vmatpush2.msra.mxu0 0.0
    %93 = vmatprep.subr.mxu0 0.0
    %94 = vmatpush2.msra.mxu0 0.0
    %95 = vmatprep.mubr.f32.mxu0 0.0
    %96 = vmatmul.mubr.f32.gmra.mxu0 %v29
    %v97 = vpop.f32.mrf.mxu0
    %v98 = vadd.f32 %v25, %v97
    %v99 = vpop.f32.mrf.mxu0
    %100 = vdwg.mxu0
    %vm101 = vcmask 31744
    %v102 = vsel %vm101, %v98, -inf
    %103 = vmax.xlane.f32.xlu0 %v102
    %v104 = vpop.xlane.xlu0 %103
    %v105 = vsub.f32 %v98, %v104
    %v106 = vmul.f32 %v105, 1.442695
    %v107 = vpow.pop %v106
    %v108 = vsel %vm101, %v107, 0.0
    %109 = vadd.xlane.f32.xlu0 %v108
    %v110 = vpop.xlane.xlu0 %109
    %v111 = vlog2.pop %v110
    %v112 = vmul.f32 %v111, 0.6931472
    %v113 = vlaneseq
    %v114 = vand.u32 %v113, 127
    %vm115 = vcmp.eq.f32.partialorder %v98, %v104
    %v116 = vsel %vm115, %v114, 4
    %v117 = vsel %vm101, %v116, 2147483647
    %v118 = vand.u32 %v117, 65535
    %v119 = vshra.s32 %v117, 16
    %v120 = vcvt.s32.f32 %v118
    %v121 = vcvt.s32.f32 %v119
    %122 = vmin.xlane.f32.xlu0 %v121
    %v123 = vpop.xlane.xlu0 %122
    %vm124 = vcmp.eq.f32.partialorder %v121, %v123
    %v125 = vsel %vm124, %v120, inf
    %126 = vmin.xlane.f32.xlu0 %v125
    %v127 = vpop.xlane.xlu0 %126
    %v128 = vcvt.f32.s32 %v127
    %v129 = vcvt.f32.s32 %v123
    %v130 = vshll.u32 %v129, 16
    %v131 = vadd.s32 %v130, %v128
    %vm132 = vcmp.eq.s32.totalorder %v114, %v131
    %v133 = vsel %vm132, 1, 0
    %v134 = vcvt.s32.f32 %v133
    %v135 = vsub.f32 %v105, %v112
    %v136 = vmul.f32 %v135, %v134
    %v137 = vsel %vm101, %v136, 0.0
    %138 = vadd.xlane.f32.xlu0 %v137
    %v139 = vpop.xlane.xlu0 %138
    %v140 = vmul.f32 %v107, %v105
    %v141 = vsel %vm101, %v140, 0.0
    %142 = vadd.xlane.f32.xlu0 %v141
    %v143 = vpop.xlane.xlu0 %142
    %v144 = vrcp.pop %v110
    %v145 = vmul.f32 %v143, %v144
    %v146 = vsub.f32 %v112, %v145
    %v147 = vcvt.s32.f32 %v131
    %vm148 = vcmp.eq.s32.totalorder %v114, 0
    %vm149 = vcmp.eq.s32.totalorder %v114, 1
    %vm150 = vcmp.eq.s32.totalorder %v114, 2
    %v151 = vsel %vm150, %v146, %v147
    %v152 = vsel %vm149, %v139, %v151
    %154 = vset.pattern.permute.xlu0 4
    %155 = vperm.xlu0 %154, %v98
    %v156 = vpop.permute.xlu0 %155
    %v158 = vsel %vm148, %v156, %v152
    %vm159 = vcmask 64512
    %160 = vst.msk [vmem:[#allocation2] sm:$0xff] %vm159, %v158
    // Predicated region
    $region14: #{tpu_custom_call.1} parent=1 // pred_check
      _
    $region15: #{tpu_custom_call.1} parent=1 // pred_check_branch
      %162 = sbr.rel (0) target = $region17
    $region16: #{tpu_custom_call.1} parent=1 // pred_region
      %s164 = ssub.s32 128, 128
      %165 = vsyncadd [#allocation3], %s164
      %s167 = sshll.u32 [#allocation2], 4
      %s168 = int_to_ptr.vmem [resolvable:$true] %s167
      %170 = dma.vmem_to_hbm [thread:$0]  %s168, 128, %s3, [#allocation3]
    $region17: #{tpu_custom_call.1} parent=1 // pred_fallthru
      _
    // Predicated region
    $region18: #{tpu_custom_call.1} parent=1 // pred_check
      _
    $region19: #{tpu_custom_call.1} parent=1 // pred_check_branch
      %172 = sbr.rel (0) target = $region21
    $region20: #{tpu_custom_call.1} parent=1 // pred_region
      %173 = dma.done [#allocation3], 128
    $region21: #{tpu_custom_call.1} parent=1 // pred_fallthru
      _
    %174 = vsyncpa [#allocation3], 1

</llo_original>
